<compile_context>
chip_gen: v5e
topology: v5e:2x2
jax: 0.10.0
libtpu: 0.0.40
codegen_flags: <defaults>
</compile_context>

<pallas_src>
import math

import jax
import jax.numpy as jnp
import numpy as np
from jax import lax
from jax.experimental import pallas as pl
from jax.experimental.pallas import tpu as pltpu

PAD = 2          # k_size // 2 for k_size = 4
KSIZE = 4
SIZE_HIDDEN = 4  # hidden expansion of the P/U branches


def _round_up(n, m):
    return -(-n // m) * m


# ------------------------------------------------------------------
# Parameter setup (deterministic, PyTorch Conv1d default-style uniform init)
# ------------------------------------------------------------------
def _init_conv(key, cout, cin, k):
    k1, k2 = jax.random.split(key)
    bound = 1.0 / math.sqrt(cin * k)
    w = jax.random.uniform(k1, (cout, cin, k), jnp.float32, -bound, bound)
    b = jax.random.uniform(k2, (cout,), jnp.float32, -bound, bound)
    return w, b


def make_params(key, in_planes):
    keys = jax.random.split(key, 8)
    C, H = in_planes, in_planes * SIZE_HIDDEN
    P = (*_init_conv(keys[0], H, C, KSIZE), *_init_conv(keys[1], C, H, 2))
    U = (*_init_conv(keys[2], H, C, KSIZE), *_init_conv(keys[3], C, H, 2))
    phi = (*_init_conv(keys[4], C, C, KSIZE), *_init_conv(keys[5], C, C, 2))
    psi = (*_init_conv(keys[6], C, C, KSIZE), *_init_conv(keys[7], C, C, 2))
    return dict(P=P, U=U, phi=phi, psi=psi)


# ------------------------------------------------------------------
# Weight packing: every conv tap as a (Cout, Cin) block (8-row aligned) inside ONE
# weight slab, and every bias as a (Cout, 1) column inside ONE bias slab.
# ------------------------------------------------------------------
def _pack_params(params, operand_dtype):
    order = ("P", "phi", "U", "psi")
    convs = []
    for name in order:
        w1, b1, w2, b2 = params[name]
        convs.append((name + "1", w1, b1))
        convs.append((name + "2", w2, b2))
    wmax = max(int(w.shape[1]) for _, w, _ in convs)

    w_blocks, b_blocks, cfg = [], [], {}
    wrow = brow = 0
    for cname, w, b in convs:
        cout, cin, k = (int(s) for s in w.shape)
        rpad = _round_up(cout, 8)
        taps = []
        for j in range(k):
            blk = jnp.zeros((rpad, wmax), jnp.float32).at[:cout, :cin].set(w[:, :, j])
            w_blocks.append(blk)
            taps.append(wrow)
            wrow += rpad
        b_blocks.append(jnp.zeros((rpad, 1), jnp.float32).at[:cout, 0].set(b))
        cfg[cname] = (tuple(taps), brow, cout, cin, k)
        brow += rpad
    wslab = jnp.concatenate(w_blocks, axis=0).astype(operand_dtype)  # (RW, wmax)
    bslab = jnp.concatenate(b_blocks, axis=0)                        # (RB, 1)  f32
    return wslab, bslab, cfg


# ------------------------------------------------------------------
# Fused kernel factory.  Layout inside the kernel: channel-major (C, N) with
# N = round_up(bt*Lp, 128); each batch element occupies a contiguous Lp-lane block.
# Valid samples live at block offsets [0, Lh); offsets [Lh, Lp) are halo scratch.
# ------------------------------------------------------------------
def _make_kernel(Lh, Lp, cfg, operand_dtype):

    def kernel(x_ref, w_ref, b_ref, c_ref, d_ref):
        xe = x_ref[0, 0, :, :]        # (C, N) f32, even samples
        xo = x_ref[0, 1, :, :]        # (C, N) f32, odd samples

        pos = lax.broadcasted_iota(jnp.int32, xe.shape, 1) % Lp  # offset within Lp block

        def _roll(z, s):
            s = s % z.shape[1]
            return z if s == 0 else pltpu.roll(z, shift=s, axis=1)

        def pad_blocks(z, shifts):
            # Build a length-Lp "padded" block from data valid at offsets [0, Lh):
            # main body pad[p] = z[p-2] (roll +2); the 4 edge lanes per block are
            # patched with extra rolls selected by the lane offset (all XLU/VPU work,
            # no concatenates / materialized copies).
            s0, s1, s2a, s2b = shifts
            out = _roll(z, 2)
            out = jnp.where(pos == 0, _roll(z, s0), out)
            out = jnp.where(pos == 1, _roll(z, s1), out)
            out = jnp.where(pos == Lh + 2, _roll(z, s2a), out)
            out = jnp.where(pos == Lh + 3, _roll(z, s2b), out)
            return out

        replicate = lambda z: pad_blocks(z, (0, 1, 3, 4))   # torch ReplicationPad1d(2)
        reflect = lambda z: pad_blocks(z, (-2, 0, 4, 6))    # torch ReflectionPad1d(2)

        def conv(x, cname):
            # k-tap Conv1d as k accumulating matmuls W_j @ roll(x, -j)  (one per tap,
            # full batch-tile lane width N, bf16 operands, f32 accumulation).
            taps, boff, cout, cin, k = cfg[cname]
            acc = None
            for j in range(k):
                xj = (x if j == 0 else _roll(x, -j)).astype(operand_dtype)
                prod = jnp.dot(w_ref[taps[j]:taps[j] + cout, :cin], xj,
                               preferred_element_type=jnp.float32)
                acc = prod if acc is None else acc + prod
            return acc + b_ref[boff:boff + cout, :]          # (Cout, 1) lane-broadcast bias

        def branch(x_pad, name, relu):
            h = conv(x_pad, name + "1")
            if relu:
                h = jnp.maximum(h, 0.0)                      # Dropout = identity (eval)
            return jnp.tanh(conv(h, name + "2"))             # Dropout = identity (eval)

        # --- d = x_odd * exp(phi(x_even)) - P(x_even) ---
        p = branch(reflect(xe), "P", relu=True)
        phi = branch(replicate(xe), "phi", relu=False)
        d = xo * jnp.exp(phi) - p
        d_ref[0, :, :] = d.astype(d_ref.dtype)

        # --- c = x_even * exp(psi(d)) + U(d)   (d stays in registers) ---
        d_pad = replicate(d)
        u = branch(d_pad, "U", relu=True)
        psi = branch(d_pad, "psi", relu=False)
        c = xe * jnp.exp(psi) + u
        c_ref[0, :, :] = c.astype(c_ref.dtype)

    return kernel


# ------------------------------------------------------------------
# VMEM-aware batch-tile selection.  min_grid_steps defaults to 1 (v5e/v6e: one fat
# step is best); on v7x pass min_grid_steps=4 so both TensorCores get pipelined work.
# ------------------------------------------------------------------
def _pick_bt(B, C, H, Lp, vmem_budget_bytes=24 << 20, min_grid_steps=1):
    per_elem = 4 * Lp * (2 * 4 * C + 6 * H + 14 * C)   # io (dbl-buffered) + intermediates
    cap = max(1, int(vmem_budget_bytes // max(per_elem, 1)))
    divisors = [t for t in range(1, B + 1) if B % t == 0 and t <= cap]
    if not divisors:
        return 1
    preferred = [t for t in divisors if (B // t) >= min_grid_steps]
    return max(preferred) if preferred else max(divisors)


# ------------------------------------------------------------------
# Full LiftingScheme forward (splitting=True, modified=False, simple_lifting=False)
# ------------------------------------------------------------------
def lifting_scheme_forward(x, params, *, bt=None, min_grid_steps=1,
                           operand_dtype=jnp.bfloat16, out_dtype=jnp.float32,
                           vmem_budget_bytes=24 << 20):
    """x: (B, L, C) -> (c, d), each (B, C, L//2), like the PyTorch module."""
    B, L, C = x.shape
    if L % 2 != 0:
        raise ValueError("sequence length L must be even")
    Lh = L // 2
    if Lh < PAD + 1:
        raise ValueError("L//2 must exceed the reflection pad (>= 3)")
    Lp = Lh + 2 * PAD
    H = int(params["P"][0].shape[0])

    if bt is None:
        bt = _pick_bt(B, C, H, Lp, vmem_budget_bytes, min_grid_steps)
    if B % bt != 0:
        raise ValueError(f"bt={bt} must divide batch size B={B}")
    Bg = B // bt
    nlane = _round_up(bt * Lp, 128)   # lane-dense unmasked stores; safe lane rolls

    x = x.astype(jnp.float32)
    x_even = jnp.transpose(x[:, ::2, :], (0, 2, 1))    # (B, C, Lh)
    x_odd = jnp.transpose(x[:, 1::2, :], (0, 2, 1))    # (B, C, Lh)

    def group(a):                                      # (B, C, Lh) -> (Bg, C, nlane)
        a = jnp.pad(a, ((0, 0), (0, 0), (0, Lp - Lh)))               # halo scratch lanes
        a = a.reshape(Bg, bt, C, Lp).transpose(0, 2, 1, 3).reshape(Bg, C, bt * Lp)
        if nlane != bt * Lp:
            a = jnp.pad(a, ((0, 0), (0, 0), (0, nlane - bt * Lp)))   # round lanes to 128
        return a

    x_in = jnp.stack([group(x_even), group(x_odd)], axis=1)          # (Bg, 2, C, nlane)

    wslab, bslab, cfg = _pack_params(params, operand_dtype)
    kernel = _make_kernel(Lh, Lp, cfg, operand_dtype)

    slab_bytes = Bg * C * nlane * 4
    wbytes = int(wslab.size * wslab.dtype.itemsize + bslab.size * 4)
    cost = pl.CostEstimate(
        flops=int(2 * Bg * nlane * (2 * (KSIZE * H * C + 2 * C * H)
                                    + 2 * (KSIZE * C * C + 2 * C * C))),
        transcendentals=int(6 * Bg * nlane * C),
        bytes_accessed=int(4 * slab_bytes + wbytes))

    io_block_bytes = (2 + 2) * C * nlane * 4          # 2 input + 2 output f32 blocks
    step_bytes = 2 * io_block_bytes + 4 * nlane * (6 * H + 14 * C) + 2 * wbytes
    vmem_limit = int(min(64 << 20, max(32 << 20, 4 * step_bytes)))

    c_lp, d_lp = pl.pallas_call(
        kernel,
        out_shape=(jax.ShapeDtypeStruct((Bg, C, nlane), out_dtype),
                   jax.ShapeDtypeStruct((Bg, C, nlane), out_dtype)),
        grid_spec=pltpu.PrefetchScalarGridSpec(
            num_scalar_prefetch=0,
            grid=(Bg,),
            in_specs=[pl.BlockSpec((1, 2, C, nlane), lambda g: (g, 0, 0, 0)),
                      pl.BlockSpec(wslab.shape, lambda g: (0, 0)),
                      pl.BlockSpec(bslab.shape, lambda g: (0, 0))],
            out_specs=(pl.BlockSpec((1, C, nlane), lambda g: (g, 0, 0)),
                       pl.BlockSpec((1, C, nlane), lambda g: (g, 0, 0)))),
        compiler_params=pltpu.CompilerParams(
            dimension_semantics=("parallel",),
            vmem_limit_bytes=vmem_limit),
        cost_estimate=cost,
    )(x_in, wslab, bslab)

    def ungroup(a):                                    # (Bg, C, nlane) -> (B, C, Lh)
        a = a[:, :, :bt * Lp].reshape(Bg, C, bt, Lp)[..., :Lh]
        return a.transpose(0, 2, 1, 3).reshape(B, C, Lh)

    return ungroup(c_lp), ungroup(d_lp)


# ------------------------------------------------------------------
# Pure-JAX reference (mirrors the PyTorch NCW conv pipeline; dropout = identity).
# op_dtype selects the conv-operand precision so both kernel paths can be checked.
# ------------------------------------------------------------------
def _ref_conv(x, w, b, op_dtype):
    y = lax.conv_general_dilated(
        x.astype(op_dtype), w.astype(op_dtype), (1,), "VALID",
        dimension_numbers=("NCH", "OIH", "NCH"),
        preferred_element_type=jnp.float32)
    return y + b[None, :, None]


def ref_forward(x, params, op_dtype=jnp.float32):
    x_even = jnp.transpose(x[:, ::2, :], (0, 2, 1))
    x_odd = jnp.transpose(x[:, 1::2, :], (0, 2, 1))

    def seq_pu(z, prm, mode):
        w1, b1, w2, b2 = prm
        zp = jnp.pad(z, ((0, 0), (0, 0), (PAD, PAD)), mode=mode)
        h = jax.nn.relu(_ref_conv(zp, w1, b1, op_dtype))
        return jnp.tanh(_ref_conv(h, w2, b2, op_dtype))

    def seq_phi(z, prm):
        w1, b1, w2, b2 = prm
        zp = jnp.pad(z, ((0, 0), (0, 0), (PAD, PAD)), mode="edge")
        h = _ref_conv(zp, w1, b1, op_dtype)
        return jnp.tanh(_ref_conv(h, w2, b2, op_dtype))

    d = x_odd * jnp.exp(seq_phi(x_even, params["phi"])) - seq_pu(x_even, params["P"], "reflect")
    c = x_even * jnp.exp(seq_phi(d, params["psi"])) + seq_pu(d, params["U"], "edge")
    return c, d


if __name__ == "__main__":
    B, L, C = 2, 16, 4      # batch=2, seq=16, in_planes=4  (hidden = 16)
    key = jax.random.PRNGKey(0)
    kx, kp = jax.random.split(key)
    x = jax.random.normal(kx, (B, L, C), jnp.float32)
    params = make_params(kp, C)

    # (1) f32 MXU-operand path: tight structural check (pads, taps, lifting formulas).
    fwd_f32 = jax.jit(lambda xx, pp: lifting_scheme_forward(xx, pp, operand_dtype=jnp.float32))
    c32, d32 = fwd_f32(x, params)
    jax.block_until_ready((c32, d32))
    c_r32, d_r32 = ref_forward(x, params, jnp.float32)
    np.testing.assert_allclose(np.asarray(c32), np.asarray(c_r32), atol=5e-5, rtol=5e-5)
    np.testing.assert_allclose(np.asarray(d32), np.asarray(d_r32), atol=5e-5, rtol=5e-5)

    # (2) default perf path: bf16 MXU operands, f32 accumulation / activations.
    fwd = jax.jit(lifting_scheme_forward)
    c, d = fwd(x, params)
    jax.block_until_ready((c, d))
    c_rbf, d_rbf = ref_forward(x, params, jnp.bfloat16)
    np.testing.assert_allclose(np.asarray(c), np.asarray(c_rbf), atol=2e-2, rtol=2e-2)
    np.testing.assert_allclose(np.asarray(d), np.asarray(d_rbf), atol=2e-2, rtol=2e-2)

    print("KERNEL_OK")
</pallas_src>

<mosaic_0001>
module attributes {stable_mosaic.version = 11 : i64} {
  func.func @kernel(%arg0: i32, %arg1: memref<1x2x4x128xf32, #tpu.memory_space<vmem>>, %arg2: memref<256x16xf32, #tpu.memory_space<vmem>>, %arg3: memref<80x1xf32, #tpu.memory_space<vmem>>, %arg4: memref<1x4x128xf32, #tpu.memory_space<vmem>>, %arg5: memref<1x4x128xf32, #tpu.memory_space<vmem>>) attributes {dimension_semantics = [#tpu.dimension_semantics<parallel>], iteration_bounds = array<i64: 1>, scalar_prefetch = 0 : i64, scratch_operands = 0 : i64, tpu.core_type = #tpu.core_type<tc>, window_params = [{transform_indices = @transform_0, window_bounds = array<i64: 1, 2, 4, 128>}, {pipeline_mode = #tpu.pipeline_mode<synchronous>, transform_indices = @transform_1, window_bounds = array<i64: 256, 16>}, {pipeline_mode = #tpu.pipeline_mode<synchronous>, transform_indices = @transform_2, window_bounds = array<i64: 80, 1>}, {transform_indices = @transform_3, window_bounds = array<i64: 1, 4, 128>}, {transform_indices = @transform_4, window_bounds = array<i64: 1, 4, 128>}]} {
    %c0 = arith.constant 0 : index
    %c0_0 = arith.constant 0 : index
    %c0_1 = arith.constant 0 : index
    %c0_2 = arith.constant 0 : index
    %0 = vector.load %arg1[%c0, %c0_0, %c0_1, %c0_2] : memref<1x2x4x128xf32, #tpu.memory_space<vmem>>, vector<1x1x4x128xf32>
    %1 = vector.shape_cast %0 : vector<1x1x4x128xf32> to vector<4x128xf32>
    %c0_3 = arith.constant 0 : index
    %c1 = arith.constant 1 : index
    %c0_4 = arith.constant 0 : index
    %c0_5 = arith.constant 0 : index
    %2 = vector.load %arg1[%c0_3, %c1, %c0_4, %c0_5] : memref<1x2x4x128xf32, #tpu.memory_space<vmem>>, vector<1x1x4x128xf32>
    %3 = vector.shape_cast %2 : vector<1x1x4x128xf32> to vector<4x128xf32>
    %4 = tpu.iota {dimensions = array<i32: 1>} : vector<4x128xi32>
    %c12_i32 = arith.constant 12 : i32
    %c0_i32 = arith.constant 0 : i32
    %5 = arith.cmpi eq, %c12_i32, %c0_i32 : i32
    %c1_i32 = arith.constant 1 : i32
    %6 = arith.select %5, %c1_i32, %c12_i32 : i32
    %7 = vector.broadcast %6 : i32 to vector<4x128xi32>
    %8 = arith.remsi %4, %7 : vector<4x128xi32>
    %c0_i32_6 = arith.constant 0 : i32
    %9 = vector.broadcast %c0_i32_6 : i32 to vector<4x128xi32>
    %10 = arith.cmpi ne, %8, %9 : vector<4x128xi32>
    %c0_i32_7 = arith.constant 0 : i32
    %11 = vector.broadcast %c0_i32_7 : i32 to vector<4x128xi32>
    %12 = arith.cmpi slt, %8, %11 : vector<4x128xi32>
    %c0_i32_8 = arith.constant 0 : i32
    %13 = arith.cmpi slt, %6, %c0_i32_8 : i32
    %14 = vector.broadcast %13 : i1 to vector<4x128xi1>
    %15 = vector.broadcast %14 : vector<4x128xi1> to vector<4x128xi1>
    %16 = arith.xori %12, %15 : vector<4x128xi1>
    %17 = arith.andi %16, %10 : vector<4x128xi1>
    %18 = vector.broadcast %6 : i32 to vector<4x128xi32>
    %19 = arith.addi %8, %18 : vector<4x128xi32>
    %20 = arith.select %17, %19, %8 : vector<4x128xi1>, vector<4x128xi32>
    %c2_i32 = arith.constant 2 : i32
    %21 = tpu.dynamic_rotate %1 by %c2_i32 dim 1 : vector<4x128xf32>, i32 -> vector<4x128xf32>
    %c0_i32_9 = arith.constant 0 : i32
    %22 = vector.broadcast %c0_i32_9 : i32 to vector<4x128xi32>
    %23 = arith.cmpi eq, %20, %22 : vector<4x128xi32>
    %c126_i32 = arith.constant 126 : i32
    %24 = tpu.dynamic_rotate %1 by %c126_i32 dim 1 : vector<4x128xf32>, i32 -> vector<4x128xf32>
    %25 = arith.select %23, %24, %21 : vector<4x128xi1>, vector<4x128xf32>
    %c1_i32_10 = arith.constant 1 : i32
    %26 = vector.broadcast %c1_i32_10 : i32 to vector<4x128xi32>
    %27 = arith.cmpi eq, %20, %26 : vector<4x128xi32>
    %28 = arith.select %27, %1, %25 : vector<4x128xi1>, vector<4x128xf32>
    %c10_i32 = arith.constant 10 : i32
    %29 = vector.broadcast %c10_i32 : i32 to vector<4x128xi32>
    %30 = arith.cmpi eq, %20, %29 : vector<4x128xi32>
    %c4_i32 = arith.constant 4 : i32
    %31 = tpu.dynamic_rotate %1 by %c4_i32 dim 1 : vector<4x128xf32>, i32 -> vector<4x128xf32>
    %32 = arith.select %30, %31, %28 : vector<4x128xi1>, vector<4x128xf32>
    %c11_i32 = arith.constant 11 : i32
    %33 = vector.broadcast %c11_i32 : i32 to vector<4x128xi32>
    %34 = arith.cmpi eq, %20, %33 : vector<4x128xi32>
    %c6_i32 = arith.constant 6 : i32
    %35 = tpu.dynamic_rotate %1 by %c6_i32 dim 1 : vector<4x128xf32>, i32 -> vector<4x128xf32>
    %36 = arith.select %34, %35, %32 : vector<4x128xi1>, vector<4x128xf32>
    %c0_11 = arith.constant 0 : index
    %c0_12 = arith.constant 0 : index
    %37 = vector.load %arg2[%c0_11, %c0_12] : memref<256x16xf32, #tpu.memory_space<vmem>>, vector<16x4xf32>
    %cst = arith.constant dense<0.000000e+00> : vector<16x128xf32>
    %38 = tpu.matmul %37, %36, %cst {dimension_numbers = #tpu.dot_dimension_numbers<[1], [0], [0], [1], [0, 0, 1, 1], [], []>} : vector<16x4xf32>, vector<4x128xf32>, vector<16x128xf32> -> vector<16x128xf32>
    %c127_i32 = arith.constant 127 : i32
    %39 = tpu.dynamic_rotate %36 by %c127_i32 dim 1 : vector<4x128xf32>, i32 -> vector<4x128xf32>
    %c16 = arith.constant 16 : index
    %c0_13 = arith.constant 0 : index
    %40 = vector.load %arg2[%c16, %c0_13] : memref<256x16xf32, #tpu.memory_space<vmem>>, vector<16x4xf32>
    %cst_14 = arith.constant dense<0.000000e+00> : vector<16x128xf32>
    %41 = tpu.matmul %40, %39, %cst_14 {dimension_numbers = #tpu.dot_dimension_numbers<[1], [0], [0], [1], [0, 0, 1, 1], [], []>} : vector<16x4xf32>, vector<4x128xf32>, vector<16x128xf32> -> vector<16x128xf32>
    %42 = arith.addf %38, %41 : vector<16x128xf32>
    %c126_i32_15 = arith.constant 126 : i32
    %43 = tpu.dynamic_rotate %36 by %c126_i32_15 dim 1 : vector<4x128xf32>, i32 -> vector<4x128xf32>
    %c32 = arith.constant 32 : index
    %c0_16 = arith.constant 0 : index
    %44 = vector.load %arg2[%c32, %c0_16] : memref<256x16xf32, #tpu.memory_space<vmem>>, vector<16x4xf32>
    %cst_17 = arith.constant dense<0.000000e+00> : vector<16x128xf32>
    %45 = tpu.matmul %44, %43, %cst_17 {dimension_numbers = #tpu.dot_dimension_numbers<[1], [0], [0], [1], [0, 0, 1, 1], [], []>} : vector<16x4xf32>, vector<4x128xf32>, vector<16x128xf32> -> vector<16x128xf32>
    %46 = arith.addf %42, %45 : vector<16x128xf32>
    %c125_i32 = arith.constant 125 : i32
    %47 = tpu.dynamic_rotate %36 by %c125_i32 dim 1 : vector<4x128xf32>, i32 -> vector<4x128xf32>
    %c48 = arith.constant 48 : index
    %c0_18 = arith.constant 0 : index
    %48 = vector.load %arg2[%c48, %c0_18] : memref<256x16xf32, #tpu.memory_space<vmem>>, vector<16x4xf32>
    %cst_19 = arith.constant dense<0.000000e+00> : vector<16x128xf32>
    %49 = tpu.matmul %48, %47, %cst_19 {dimension_numbers = #tpu.dot_dimension_numbers<[1], [0], [0], [1], [0, 0, 1, 1], [], []>} : vector<16x4xf32>, vector<4x128xf32>, vector<16x128xf32> -> vector<16x128xf32>
    %50 = arith.addf %46, %49 : vector<16x128xf32>
    %c0_20 = arith.constant 0 : index
    %c0_21 = arith.constant 0 : index
    %51 = vector.load %arg3[%c0_20, %c0_21] : memref<80x1xf32, #tpu.memory_space<vmem>>, vector<16x1xf32>
    %52 = vector.broadcast %51 : vector<16x1xf32> to vector<16x128xf32>
    %53 = arith.addf %50, %52 : vector<16x128xf32>
    %cst_22 = arith.constant 0.000000e+00 : f32
    %54 = vector.broadcast %cst_22 : f32 to vector<16x128xf32>
    %55 = arith.maximumf %53, %54 : vector<16x128xf32>
    %c64 = arith.constant 64 : index
    %c0_23 = arith.constant 0 : index
    %56 = vector.load %arg2[%c64, %c0_23] : memref<256x16xf32, #tpu.memory_space<vmem>>, vector<4x16xf32>
    %cst_24 = arith.constant dense<0.000000e+00> : vector<4x128xf32>
    %57 = tpu.matmul %56, %55, %cst_24 {dimension_numbers = #tpu.dot_dimension_numbers<[1], [0], [0], [1], [0, 0, 1, 1], [], []>} : vector<4x16xf32>, vector<16x128xf32>, vector<4x128xf32> -> vector<4x128xf32>
    %c127_i32_25 = arith.constant 127 : i32
    %58 = tpu.dynamic_rotate %55 by %c127_i32_25 dim 1 : vector<16x128xf32>, i32 -> vector<16x128xf32>
    %c72 = arith.constant 72 : index
    %c0_26 = arith.constant 0 : index
    %59 = vector.load %arg2[%c72, %c0_26] : memref<256x16xf32, #tpu.memory_space<vmem>>, vector<4x16xf32>
    %cst_27 = arith.constant dense<0.000000e+00> : vector<4x128xf32>
    %60 = tpu.matmul %59, %58, %cst_27 {dimension_numbers = #tpu.dot_dimension_numbers<[1], [0], [0], [1], [0, 0, 1, 1], [], []>} : vector<4x16xf32>, vector<16x128xf32>, vector<4x128xf32> -> vector<4x128xf32>
    %61 = arith.addf %57, %60 : vector<4x128xf32>
    %c16_28 = arith.constant 16 : index
    %c0_29 = arith.constant 0 : index
    %62 = vector.load %arg3[%c16_28, %c0_29] : memref<80x1xf32, #tpu.memory_space<vmem>>, vector<4x1xf32>
    %63 = vector.broadcast %62 : vector<4x1xf32> to vector<4x128xf32>
    %64 = arith.addf %61, %63 : vector<4x128xf32>
    %65 = math.tanh %64 : vector<4x128xf32>
    %c2_i32_30 = arith.constant 2 : i32
    %66 = tpu.dynamic_rotate %1 by %c2_i32_30 dim 1 : vector<4x128xf32>, i32 -> vector<4x128xf32>
    %c0_i32_31 = arith.constant 0 : i32
    %67 = vector.broadcast %c0_i32_31 : i32 to vector<4x128xi32>
    %68 = arith.cmpi eq, %20, %67 : vector<4x128xi32>
    %69 = arith.select %68, %1, %66 : vector<4x128xi1>, vector<4x128xf32>
    %c1_i32_32 = arith.constant 1 : i32
    %70 = vector.broadcast %c1_i32_32 : i32 to vector<4x128xi32>
    %71 = arith.cmpi eq, %20, %70 : vector<4x128xi32>
    %c1_i32_33 = arith.constant 1 : i32
    %72 = tpu.dynamic_rotate %1 by %c1_i32_33 dim 1 : vector<4x128xf32>, i32 -> vector<4x128xf32>
    %73 = arith.select %71, %72, %69 : vector<4x128xi1>, vector<4x128xf32>
    %c10_i32_34 = arith.constant 10 : i32
    %74 = vector.broadcast %c10_i32_34 : i32 to vector<4x128xi32>
    %75 = arith.cmpi eq, %20, %74 : vector<4x128xi32>
    %c3_i32 = arith.constant 3 : i32
    %76 = tpu.dynamic_rotate %1 by %c3_i32 dim 1 : vector<4x128xf32>, i32 -> vector<4x128xf32>
    %77 = arith.select %75, %76, %73 : vector<4x128xi1>, vector<4x128xf32>
    %c11_i32_35 = arith.constant 11 : i32
    %78 = vector.broadcast %c11_i32_35 : i32 to vector<4x128xi32>
    %79 = arith.cmpi eq, %20, %78 : vector<4x128xi32>
    %c4_i32_36 = arith.constant 4 : i32
    %80 = tpu.dynamic_rotate %1 by %c4_i32_36 dim 1 : vector<4x128xf32>, i32 -> vector<4x128xf32>
    %81 = arith.select %79, %80, %77 : vector<4x128xi1>, vector<4x128xf32>
    %c80 = arith.constant 80 : index
    %c0_37 = arith.constant 0 : index
    %82 = vector.load %arg2[%c80, %c0_37] : memref<256x16xf32, #tpu.memory_space<vmem>>, vector<4x4xf32>
    %cst_38 = arith.constant dense<0.000000e+00> : vector<4x128xf32>
    %83 = tpu.matmul %82, %81, %cst_38 {dimension_numbers = #tpu.dot_dimension_numbers<[1], [0], [0], [1], [0, 0, 1, 1], [], []>} : vector<4x4xf32>, vector<4x128xf32>, vector<4x128xf32> -> vector<4x128xf32>
    %c127_i32_39 = arith.constant 127 : i32
    %84 = tpu.dynamic_rotate %81 by %c127_i32_39 dim 1 : vector<4x128xf32>, i32 -> vector<4x128xf32>
    %c88 = arith.constant 88 : index
    %c0_40 = arith.constant 0 : index
    %85 = vector.load %arg2[%c88, %c0_40] : memref<256x16xf32, #tpu.memory_space<vmem>>, vector<4x4xf32>
    %cst_41 = arith.constant dense<0.000000e+00> : vector<4x128xf32>
    %86 = tpu.matmul %85, %84, %cst_41 {dimension_numbers = #tpu.dot_dimension_numbers<[1], [0], [0], [1], [0, 0, 1, 1], [], []>} : vector<4x4xf32>, vector<4x128xf32>, vector<4x128xf32> -> vector<4x128xf32>
    %87 = arith.addf %83, %86 : vector<4x128xf32>
    %c126_i32_42 = arith.constant 126 : i32
    %88 = tpu.dynamic_rotate %81 by %c126_i32_42 dim 1 : vector<4x128xf32>, i32 -> vector<4x128xf32>
    %c96 = arith.constant 96 : index
    %c0_43 = arith.constant 0 : index
    %89 = vector.load %arg2[%c96, %c0_43] : memref<256x16xf32, #tpu.memory_space<vmem>>, vector<4x4xf32>
    %cst_44 = arith.constant dense<0.000000e+00> : vector<4x128xf32>
    %90 = tpu.matmul %89, %88, %cst_44 {dimension_numbers = #tpu.dot_dimension_numbers<[1], [0], [0], [1], [0, 0, 1, 1], [], []>} : vector<4x4xf32>, vector<4x128xf32>, vector<4x128xf32> -> vector<4x128xf32>
    %91 = arith.addf %87, %90 : vector<4x128xf32>
    %c125_i32_45 = arith.constant 125 : i32
    %92 = tpu.dynamic_rotate %81 by %c125_i32_45 dim 1 : vector<4x128xf32>, i32 -> vector<4x128xf32>
    %c104 = arith.constant 104 : index
    %c0_46 = arith.constant 0 : index
    %93 = vector.load %arg2[%c104, %c0_46] : memref<256x16xf32, #tpu.memory_space<vmem>>, vector<4x4xf32>
    %cst_47 = arith.constant dense<0.000000e+00> : vector<4x128xf32>
    %94 = tpu.matmul %93, %92, %cst_47 {dimension_numbers = #tpu.dot_dimension_numbers<[1], [0], [0], [1], [0, 0, 1, 1], [], []>} : vector<4x4xf32>, vector<4x128xf32>, vector<4x128xf32> -> vector<4x128xf32>
    %95 = arith.addf %91, %94 : vector<4x128xf32>
    %c24 = arith.constant 24 : index
    %c0_48 = arith.constant 0 : index
    %96 = vector.load %arg3[%c24, %c0_48] : memref<80x1xf32, #tpu.memory_space<vmem>>, vector<4x1xf32>
    %97 = vector.broadcast %96 : vector<4x1xf32> to vector<4x128xf32>
    %98 = arith.addf %95, %97 : vector<4x128xf32>
    %c112 = arith.constant 112 : index
    %c0_49 = arith.constant 0 : index
    %99 = vector.load %arg2[%c112, %c0_49] : memref<256x16xf32, #tpu.memory_space<vmem>>, vector<4x4xf32>
    %cst_50 = arith.constant dense<0.000000e+00> : vector<4x128xf32>
    %100 = tpu.matmul %99, %98, %cst_50 {dimension_numbers = #tpu.dot_dimension_numbers<[1], [0], [0], [1], [0, 0, 1, 1], [], []>} : vector<4x4xf32>, vector<4x128xf32>, vector<4x128xf32> -> vector<4x128xf32>
    %c127_i32_51 = arith.constant 127 : i32
    %101 = tpu.dynamic_rotate %98 by %c127_i32_51 dim 1 : vector<4x128xf32>, i32 -> vector<4x128xf32>
    %c120 = arith.constant 120 : index
    %c0_52 = arith.constant 0 : index
    %102 = vector.load %arg2[%c120, %c0_52] : memref<256x16xf32, #tpu.memory_space<vmem>>, vector<4x4xf32>
    %cst_53 = arith.constant dense<0.000000e+00> : vector<4x128xf32>
    %103 = tpu.matmul %102, %101, %cst_53 {dimension_numbers = #tpu.dot_dimension_numbers<[1], [0], [0], [1], [0, 0, 1, 1], [], []>} : vector<4x4xf32>, vector<4x128xf32>, vector<4x128xf32> -> vector<4x128xf32>
    %104 = arith.addf %100, %103 : vector<4x128xf32>
    %c32_54 = arith.constant 32 : index
    %c0_55 = arith.constant 0 : index
    %105 = vector.load %arg3[%c32_54, %c0_55] : memref<80x1xf32, #tpu.memory_space<vmem>>, vector<4x1xf32>
    %106 = vector.broadcast %105 : vector<4x1xf32> to vector<4x128xf32>
    %107 = arith.addf %104, %106 : vector<4x128xf32>
    %108 = math.tanh %107 : vector<4x128xf32>
    %109 = math.exp %108 : vector<4x128xf32>
    %110 = arith.mulf %3, %109 : vector<4x128xf32>
    %111 = arith.subf %110, %65 : vector<4x128xf32>
    %c0_56 = arith.constant 0 : index
    %c0_57 = arith.constant 0 : index
    %c0_58 = arith.constant 0 : index
    %112 = vector.load %arg5[%c0_56, %c0_57, %c0_58] : memref<1x4x128xf32, #tpu.memory_space<vmem>>, vector<1x4x128xf32>
    %113 = vector.shape_cast %112 : vector<1x4x128xf32> to vector<4x128xf32>
    %114 = vector.shape_cast %111 : vector<4x128xf32> to vector<1x4x128xf32>
    tpu.vector_store %arg5[%c0_56, %c0_57, %c0_58], %114 {strides = array<i32>} : memref<1x4x128xf32, #tpu.memory_space<vmem>>, vector<1x4x128xf32>,
    %c2_i32_59 = arith.constant 2 : i32
    %115 = tpu.dynamic_rotate %111 by %c2_i32_59 dim 1 : vector<4x128xf32>, i32 -> vector<4x128xf32>
    %c0_i32_60 = arith.constant 0 : i32
    %116 = vector.broadcast %c0_i32_60 : i32 to vector<4x128xi32>
    %117 = arith.cmpi eq, %20, %116 : vector<4x128xi32>
    %118 = arith.select %117, %111, %115 : vector<4x128xi1>, vector<4x128xf32>
    %c1_i32_61 = arith.constant 1 : i32
    %119 = vector.broadcast %c1_i32_61 : i32 to vector<4x128xi32>
    %120 = arith.cmpi eq, %20, %119 : vector<4x128xi32>
    %c1_i32_62 = arith.constant 1 : i32
    %121 = tpu.dynamic_rotate %111 by %c1_i32_62 dim 1 : vector<4x128xf32>, i32 -> vector<4x128xf32>
    %122 = arith.select %120, %121, %118 : vector<4x128xi1>, vector<4x128xf32>
    %c10_i32_63 = arith.constant 10 : i32
    %123 = vector.broadcast %c10_i32_63 : i32 to vector<4x128xi32>
    %124 = arith.cmpi eq, %20, %123 : vector<4x128xi32>
    %c3_i32_64 = arith.constant 3 : i32
    %125 = tpu.dynamic_rotate %111 by %c3_i32_64 dim 1 : vector<4x128xf32>, i32 -> vector<4x128xf32>
    %126 = arith.select %124, %125, %122 : vector<4x128xi1>, vector<4x128xf32>
    %c11_i32_65 = arith.constant 11 : i32
    %127 = vector.broadcast %c11_i32_65 : i32 to vector<4x128xi32>
    %128 = arith.cmpi eq, %20, %127 : vector<4x128xi32>
    %c4_i32_66 = arith.constant 4 : i32
    %129 = tpu.dynamic_rotate %111 by %c4_i32_66 dim 1 : vector<4x128xf32>, i32 -> vector<4x128xf32>
    %130 = arith.select %128, %129, %126 : vector<4x128xi1>, vector<4x128xf32>
    %c128 = arith.constant 128 : index
    %c0_67 = arith.constant 0 : index
    %131 = vector.load %arg2[%c128, %c0_67] : memref<256x16xf32, #tpu.memory_space<vmem>>, vector<16x4xf32>
    %cst_68 = arith.constant dense<0.000000e+00> : vector<16x128xf32>
    %132 = tpu.matmul %131, %130, %cst_68 {dimension_numbers = #tpu.dot_dimension_numbers<[1], [0], [0], [1], [0, 0, 1, 1], [], []>} : vector<16x4xf32>, vector<4x128xf32>, vector<16x128xf32> -> vector<16x128xf32>
    %c127_i32_69 = arith.constant 127 : i32
    %133 = tpu.dynamic_rotate %130 by %c127_i32_69 dim 1 : vector<4x128xf32>, i32 -> vector<4x128xf32>
    %c144 = arith.constant 144 : index
    %c0_70 = arith.constant 0 : index
    %134 = vector.load %arg2[%c144, %c0_70] : memref<256x16xf32, #tpu.memory_space<vmem>>, vector<16x4xf32>
    %cst_71 = arith.constant dense<0.000000e+00> : vector<16x128xf32>
    %135 = tpu.matmul %134, %133, %cst_71 {dimension_numbers = #tpu.dot_dimension_numbers<[1], [0], [0], [1], [0, 0, 1, 1], [], []>} : vector<16x4xf32>, vector<4x128xf32>, vector<16x128xf32> -> vector<16x128xf32>
    %136 = arith.addf %132, %135 : vector<16x128xf32>
    %c126_i32_72 = arith.constant 126 : i32
    %137 = tpu.dynamic_rotate %130 by %c126_i32_72 dim 1 : vector<4x128xf32>, i32 -> vector<4x128xf32>
    %c160 = arith.constant 160 : index
    %c0_73 = arith.constant 0 : index
    %138 = vector.load %arg2[%c160, %c0_73] : memref<256x16xf32, #tpu.memory_space<vmem>>, vector<16x4xf32>
    %cst_74 = arith.constant dense<0.000000e+00> : vector<16x128xf32>
    %139 = tpu.matmul %138, %137, %cst_74 {dimension_numbers = #tpu.dot_dimension_numbers<[1], [0], [0], [1], [0, 0, 1, 1], [], []>} : vector<16x4xf32>, vector<4x128xf32>, vector<16x128xf32> -> vector<16x128xf32>
    %140 = arith.addf %136, %139 : vector<16x128xf32>
    %c125_i32_75 = arith.constant 125 : i32
    %141 = tpu.dynamic_rotate %130 by %c125_i32_75 dim 1 : vector<4x128xf32>, i32 -> vector<4x128xf32>
    %c176 = arith.constant 176 : index
    %c0_76 = arith.constant 0 : index
    %142 = vector.load %arg2[%c176, %c0_76] : memref<256x16xf32, #tpu.memory_space<vmem>>, vector<16x4xf32>
    %cst_77 = arith.constant dense<0.000000e+00> : vector<16x128xf32>
    %143 = tpu.matmul %142, %141, %cst_77 {dimension_numbers = #tpu.dot_dimension_numbers<[1], [0], [0], [1], [0, 0, 1, 1], [], []>} : vector<16x4xf32>, vector<4x128xf32>, vector<16x128xf32> -> vector<16x128xf32>
    %144 = arith.addf %140, %143 : vector<16x128xf32>
    %c40 = arith.constant 40 : index
    %c0_78 = arith.constant 0 : index
    %145 = vector.load %arg3[%c40, %c0_78] : memref<80x1xf32, #tpu.memory_space<vmem>>, vector<16x1xf32>
    %146 = vector.broadcast %145 : vector<16x1xf32> to vector<16x128xf32>
    %147 = arith.addf %144, %146 : vector<16x128xf32>
    %cst_79 = arith.constant 0.000000e+00 : f32
    %148 = vector.broadcast %cst_79 : f32 to vector<16x128xf32>
    %149 = arith.maximumf %147, %148 : vector<16x128xf32>
    %c192 = arith.constant 192 : index
    %c0_80 = arith.constant 0 : index
    %150 = vector.load %arg2[%c192, %c0_80] : memref<256x16xf32, #tpu.memory_space<vmem>>, vector<4x16xf32>
    %cst_81 = arith.constant dense<0.000000e+00> : vector<4x128xf32>
    %151 = tpu.matmul %150, %149, %cst_81 {dimension_numbers = #tpu.dot_dimension_numbers<[1], [0], [0], [1], [0, 0, 1, 1], [], []>} : vector<4x16xf32>, vector<16x128xf32>, vector<4x128xf32> -> vector<4x128xf32>
    %c127_i32_82 = arith.constant 127 : i32
    %152 = tpu.dynamic_rotate %149 by %c127_i32_82 dim 1 : vector<16x128xf32>, i32 -> vector<16x128xf32>
    %c200 = arith.constant 200 : index
    %c0_83 = arith.constant 0 : index
    %153 = vector.load %arg2[%c200, %c0_83] : memref<256x16xf32, #tpu.memory_space<vmem>>, vector<4x16xf32>
    %cst_84 = arith.constant dense<0.000000e+00> : vector<4x128xf32>
    %154 = tpu.matmul %153, %152, %cst_84 {dimension_numbers = #tpu.dot_dimension_numbers<[1], [0], [0], [1], [0, 0, 1, 1], [], []>} : vector<4x16xf32>, vector<16x128xf32>, vector<4x128xf32> -> vector<4x128xf32>
    %155 = arith.addf %151, %154 : vector<4x128xf32>
    %c56 = arith.constant 56 : index
    %c0_85 = arith.constant 0 : index
    %156 = vector.load %arg3[%c56, %c0_85] : memref<80x1xf32, #tpu.memory_space<vmem>>, vector<4x1xf32>
    %157 = vector.broadcast %156 : vector<4x1xf32> to vector<4x128xf32>
    %158 = arith.addf %155, %157 : vector<4x128xf32>
    %159 = math.tanh %158 : vector<4x128xf32>
    %c208 = arith.constant 208 : index
    %c0_86 = arith.constant 0 : index
    %160 = vector.load %arg2[%c208, %c0_86] : memref<256x16xf32, #tpu.memory_space<vmem>>, vector<4x4xf32>
    %cst_87 = arith.constant dense<0.000000e+00> : vector<4x128xf32>
    %161 = tpu.matmul %160, %130, %cst_87 {dimension_numbers = #tpu.dot_dimension_numbers<[1], [0], [0], [1], [0, 0, 1, 1], [], []>} : vector<4x4xf32>, vector<4x128xf32>, vector<4x128xf32> -> vector<4x128xf32>
    %c127_i32_88 = arith.constant 127 : i32
    %162 = tpu.dynamic_rotate %130 by %c127_i32_88 dim 1 : vector<4x128xf32>, i32 -> vector<4x128xf32>
    %c216 = arith.constant 216 : index
    %c0_89 = arith.constant 0 : index
    %163 = vector.load %arg2[%c216, %c0_89] : memref<256x16xf32, #tpu.memory_space<vmem>>, vector<4x4xf32>
    %cst_90 = arith.constant dense<0.000000e+00> : vector<4x128xf32>
    %164 = tpu.matmul %163, %162, %cst_90 {dimension_numbers = #tpu.dot_dimension_numbers<[1], [0], [0], [1], [0, 0, 1, 1], [], []>} : vector<4x4xf32>, vector<4x128xf32>, vector<4x128xf32> -> vector<4x128xf32>
    %165 = arith.addf %161, %164 : vector<4x128xf32>
    %c126_i32_91 = arith.constant 126 : i32
    %166 = tpu.dynamic_rotate %130 by %c126_i32_91 dim 1 : vector<4x128xf32>, i32 -> vector<4x128xf32>
    %c224 = arith.constant 224 : index
    %c0_92 = arith.constant 0 : index
    %167 = vector.load %arg2[%c224, %c0_92] : memref<256x16xf32, #tpu.memory_space<vmem>>, vector<4x4xf32>
    %cst_93 = arith.constant dense<0.000000e+00> : vector<4x128xf32>
    %168 = tpu.matmul %167, %166, %cst_93 {dimension_numbers = #tpu.dot_dimension_numbers<[1], [0], [0], [1], [0, 0, 1, 1], [], []>} : vector<4x4xf32>, vector<4x128xf32>, vector<4x128xf32> -> vector<4x128xf32>
    %169 = arith.addf %165, %168 : vector<4x128xf32>
    %c125_i32_94 = arith.constant 125 : i32
    %170 = tpu.dynamic_rotate %130 by %c125_i32_94 dim 1 : vector<4x128xf32>, i32 -> vector<4x128xf32>
    %c232 = arith.constant 232 : index
    %c0_95 = arith.constant 0 : index
    %171 = vector.load %arg2[%c232, %c0_95] : memref<256x16xf32, #tpu.memory_space<vmem>>, vector<4x4xf32>
    %cst_96 = arith.constant dense<0.000000e+00> : vector<4x128xf32>
    %172 = tpu.matmul %171, %170, %cst_96 {dimension_numbers = #tpu.dot_dimension_numbers<[1], [0], [0], [1], [0, 0, 1, 1], [], []>} : vector<4x4xf32>, vector<4x128xf32>, vector<4x128xf32> -> vector<4x128xf32>
    %173 = arith.addf %169, %172 : vector<4x128xf32>
    %c64_97 = arith.constant 64 : index
    %c0_98 = arith.constant 0 : index
    %174 = vector.load %arg3[%c64_97, %c0_98] : memref<80x1xf32, #tpu.memory_space<vmem>>, vector<4x1xf32>
    %175 = vector.broadcast %174 : vector<4x1xf32> to vector<4x128xf32>
    %176 = arith.addf %173, %175 : vector<4x128xf32>
    %c240 = arith.constant 240 : index
    %c0_99 = arith.constant 0 : index
    %177 = vector.load %arg2[%c240, %c0_99] : memref<256x16xf32, #tpu.memory_space<vmem>>, vector<4x4xf32>
    %cst_100 = arith.constant dense<0.000000e+00> : vector<4x128xf32>
    %178 = tpu.matmul %177, %176, %cst_100 {dimension_numbers = #tpu.dot_dimension_numbers<[1], [0], [0], [1], [0, 0, 1, 1], [], []>} : vector<4x4xf32>, vector<4x128xf32>, vector<4x128xf32> -> vector<4x128xf32>
    %c127_i32_101 = arith.constant 127 : i32
    %179 = tpu.dynamic_rotate %176 by %c127_i32_101 dim 1 : vector<4x128xf32>, i32 -> vector<4x128xf32>
    %c248 = arith.constant 248 : index
    %c0_102 = arith.constant 0 : index
    %180 = vector.load %arg2[%c248, %c0_102] : memref<256x16xf32, #tpu.memory_space<vmem>>, vector<4x4xf32>
    %cst_103 = arith.constant dense<0.000000e+00> : vector<4x128xf32>
    %181 = tpu.matmul %180, %179, %cst_103 {dimension_numbers = #tpu.dot_dimension_numbers<[1], [0], [0], [1], [0, 0, 1, 1], [], []>} : vector<4x4xf32>, vector<4x128xf32>, vector<4x128xf32> -> vector<4x128xf32>
    %182 = arith.addf %178, %181 : vector<4x128xf32>
    %c72_104 = arith.constant 72 : index
    %c0_105 = arith.constant 0 : index
    %183 = vector.load %arg3[%c72_104, %c0_105] : memref<80x1xf32, #tpu.memory_space<vmem>>, vector<4x1xf32>
    %184 = vector.broadcast %183 : vector<4x1xf32> to vector<4x128xf32>
    %185 = arith.addf %182, %184 : vector<4x128xf32>
    %186 = math.tanh %185 : vector<4x128xf32>
    %187 = math.exp %186 : vector<4x128xf32>
    %188 = arith.mulf %1, %187 : vector<4x128xf32>
    %189 = arith.addf %188, %159 : vector<4x128xf32>
    %c0_106 = arith.constant 0 : index
    %c0_107 = arith.constant 0 : index
    %c0_108 = arith.constant 0 : index
    %190 = vector.load %arg4[%c0_106, %c0_107, %c0_108] : memref<1x4x128xf32, #tpu.memory_space<vmem>>, vector<1x4x128xf32>
    %191 = vector.shape_cast %190 : vector<1x4x128xf32> to vector<4x128xf32>
    %192 = vector.shape_cast %189 : vector<4x128xf32> to vector<1x4x128xf32>
    tpu.vector_store %arg4[%c0_106, %c0_107, %c0_108], %192 {strides = array<i32>} : memref<1x4x128xf32, #tpu.memory_space<vmem>>, vector<1x4x128xf32>,
    return
  }
  func.func @transform_0(%arg0: i32) -> (i32, i32, i32, i32) {
    %c0_i32 = arith.constant 0 : i32
    %c0_i32_0 = arith.constant 0 : i32
    %c0_i32_1 = arith.constant 0 : i32
    %c0_i32_2 = arith.constant 0 : i32
    return %arg0, %c0_i32, %c0_i32_0, %c0_i32_1 : i32, i32, i32, i32
  }
  func.func @transform_1(%arg0: i32) -> (i32, i32) {
    %c0_i32 = arith.constant 0 : i32
    %c0_i32_0 = arith.constant 0 : i32
    %c0_i32_1 = arith.constant 0 : i32
    return %c0_i32, %c0_i32_0 : i32, i32
  }
  func.func @transform_2(%arg0: i32) -> (i32, i32) {
    %c0_i32 = arith.constant 0 : i32
    %c0_i32_0 = arith.constant 0 : i32
    %c0_i32_1 = arith.constant 0 : i32
    return %c0_i32, %c0_i32_0 : i32, i32
  }
  func.func @transform_3(%arg0: i32) -> (i32, i32, i32) {
    %c0_i32 = arith.constant 0 : i32
    %c0_i32_0 = arith.constant 0 : i32
    %c0_i32_1 = arith.constant 0 : i32
    return %arg0, %c0_i32, %c0_i32_0 : i32, i32, i32
  }
  func.func @transform_4(%arg0: i32) -> (i32, i32, i32) {
    %c0_i32 = arith.constant 0 : i32
    %c0_i32_0 = arith.constant 0 : i32
    %c0_i32_1 = arith.constant 0 : i32
    return %arg0, %c0_i32, %c0_i32_0 : i32, i32, i32
  }
}

</mosaic_0001>

<llo_original>
// kernel: _lambda_.1
$region0: #{_lambda_.1}
  #allocation0 [shape = 'u32[]', space=smem, size = 0x4, offset = 0x4, fixed_abs, tag = 'smem constant byte address 0x4 - core index']
  #allocation1 [shape = 'u32[72,128]{1,0:T(1,128)}', space=vmem, size = 0x9000, scoped, tag = 'internal scratch']
  %s0 = inlined_call_operand.vmem [shape: f32[1,2,4,128], index: 0, kind: input, shape index: {}]
  %s1 = inlined_call_operand.vmem [shape: f32[256,16], index: 1, kind: input, shape index: {}]
  %s2 = inlined_call_operand.vmem [shape: f32[80,1], index: 2, kind: input, shape index: {}]
  %s3 = inlined_call_operand.vmem [shape: f32[1,4,128], index: 3, kind: output, shape index: {0}]
  %s4 = inlined_call_operand.vmem [shape: f32[1,4,128], index: 4, kind: output, shape index: {1}]
  %5 = xla_tuple %s3, %s4
  %s6 = sld [smem:[#allocation0]]
  $region30: #{_lambda_.1} parent=0
    _
  %s8 = ssub.s32 1, %s6
  %s9 = scalar_select 0, %s8, %s6
  // Predicated region
  $region2: #{_lambda_.1} parent=0 // pred_check
    _
  $region3: #{_lambda_.1} parent=0 // pred_check_branch
    %11 = sbr.rel (0) target = $region5
  $region4: #{_lambda_.1} parent=0 // pred_region
    _
  $region5: #{_lambda_.1} parent=0 // pred_fallthru
    _
  // Predicated region
  $region6: #{_lambda_.1} parent=0 // pred_check
    _
  $region7: #{_lambda_.1} parent=0 // pred_check_branch
    %13 = sbr.rel (0) target = $region9
  $region8: #{_lambda_.1} parent=0 // pred_region
    _
  $region9: #{_lambda_.1} parent=0 // pred_fallthru
    _
  // Predicated region
  $region10: #{_lambda_.1} parent=0 // pred_check
    _
  $region11: #{_lambda_.1} parent=0 // pred_check_branch
    %15 = sbr.rel (0) target = $region13
  $region12: #{_lambda_.1} parent=0 // pred_region
    _
  $region13: #{_lambda_.1} parent=0 // pred_fallthru
    _
  %v16 = vld [vmem:[%s0] sm:$0xf]
  %s17 = scalar_lea.vmem %s0, 4
  %v18 = vld [vmem:[%s17] sm:$0xf]
  %v19 = vlaneseq
  %v20 = vand.u32 %v19, 127
  %vm21 = vcmp.lt.s32.totalorder %v20, 0
  %v22 = vsub.s32 0, %v20
  %v23 = vsel %vm21, %v22, %v20
  %v24 = vand.u32 %v23, 65535
  %v25 = vshrl.u32 %v23, 16
  %v27 = vmul.u32 %v24, 43691
  %v28 = vmul.u32 %v24, 43690
  %v29 = vmul.u32 %v25, 43691
  %v30 = vmul.u32 %v25, 43690
  %v31 = vshll.u32 %v28, 16
  %v32 = vshrl.u32 %v28, 16
  %v33 = vshll.u32 %v29, 16
  %v34 = vshrl.u32 %v29, 16
  %vm35 = vc.u32 %v27, %v31
  %v36 = vsel %vm35, 1, 0
  %v37 = vadd.s32 %v27, %v31
  %v38 = vadd.s32 %v30, %v36
  %vm39 = vc.u32 %v37, %v33
  %v40 = vsel %vm39, 1, 0
  %v41 = vadd.s32 %v37, %v33
  %v42 = vadd.s32 %v38, %v40
  %v43 = vadd.s32 %v42, %v32
  %v44 = vadd.s32 %v43, %v34
  %v45 = vshrl.u32 %v44, 3
  %v46 = vmul.u32 %v45, 12
  %v47 = vsub.s32 %v23, %v46
  %v48 = vsub.s32 0, %v47
  %v49 = vsel %vm21, %v48, %v47
  %vm50 = vcmp.ne.s32.totalorder %v49, 0
  %vm51 = vcmp.lt.s32.totalorder %v49, 0
  %vm52 = vmand %vm51, %vm50
  %v53 = vadd.s32 %v49, 12
  %v54 = vsel %vm52, %v53, %v49
  %55 = vrot.lane.b32.xlu0 %v16, 2
  %v56 = vpop.permute.xlu0 %55
  %vm57 = vcmp.eq.s32.totalorder %v54, 0
  %58 = vrot.lane.b32.xlu0 %v16, 126
  %v59 = vpop.permute.xlu0 %58
  %v60 = vsel %vm57, %v59, %v56
  %vm61 = vcmp.eq.s32.totalorder %v54, 1
  %v62 = vsel %vm61, %v16, %v60
  %vm63 = vcmp.eq.s32.totalorder %v54, 10
  %64 = vrot.lane.b32.xlu0 %v16, 4
  %v65 = vpop.permute.xlu0 %64
  %v66 = vsel %vm63, %v65, %v62
  %vm67 = vcmp.eq.s32.totalorder %v54, 11
  %68 = vrot.lane.b32.xlu0 %v16, 6
  %v69 = vpop.permute.xlu0 %68
  %v70 = vsel %vm67, %v69, %v66
  %v71 = vld [vmem:[%s1] sm:$0xff]
  %v72 = vld [vmem:[%s1 + $0x8] sm:$0xff]
  %73 = vrot.lane.b32.xlu0 %v70, 127
  %v74 = vpop.permute.xlu0 %73
  %v75 = vld [vmem:[%s1 + $0x10] sm:$0xff]
  %v76 = vld [vmem:[%s1 + $0x18] sm:$0xff]
  %vm77 = vcmask 31744
  %v79 = vsel %vm77, %v75, 0
  %v82 = vsel %vm77, %v76, 0
  %vm84 = vcmask 1043456
  %v86 = vsel %vm84, %v74, 0
  %88 = vmatpush.msra.mxu0 0.0
  %89 = vmatpush.msra.mxu0 0.0
  %90 = vmatpush.msra.mxu0 0.0
  %91 = vmatpush.msra.mxu0 0.0
  %92 = vmatpush.msra.mxu0 0.0
  %93 = vmatpush.msra.mxu0 0.0
  %94 = vmatpush.msra.mxu0 0.0
  %95 = vmatpush.msra.mxu0 0.0
  %96 = vmatpush.msra.mxu0 0.0
  %97 = vmatpush.msra.mxu0 0.0
  %98 = vmatpush.msra.mxu0 0.0
  %99 = vmatpush.msra.mxu0 0.0
  %100 = vmatpush.msra.mxu0 0.0
  %101 = vmatpush.msra.mxu0 0.0
  %102 = vmatpush.msra.mxu0 0.0
  %103 = vmatpush.msra.mxu0 %v86
  %104 = vmatmul.f32.gmra.mxu0 %v79
  %v105 = vpop.f32.mrf.mxu0
  %v106 = vadd.f32 0.0, %v105
  %107 = vmatmul.f32.gmra.mxu0 %v82
  %v108 = vpop.f32.mrf.mxu0
  %v109 = vadd.f32 0.0, %v108
  %110 = vdwg.mxu0
  %v112 = vsel %vm77, %v71, 0
  %v115 = vsel %vm77, %v72, 0
  %v118 = vsel %vm84, %v70, 0
  %120 = vmatpush.msra.mxu0 0.0
  %121 = vmatpush.msra.mxu0 0.0
  %122 = vmatpush.msra.mxu0 0.0
  %123 = vmatpush.msra.mxu0 0.0
  %124 = vmatpush.msra.mxu0 0.0
  %125 = vmatpush.msra.mxu0 0.0
  %126 = vmatpush.msra.mxu0 0.0
  %127 = vmatpush.msra.mxu0 0.0
  %128 = vmatpush.msra.mxu0 0.0
  %129 = vmatpush.msra.mxu0 0.0
  %130 = vmatpush.msra.mxu0 0.0
  %131 = vmatpush.msra.mxu0 0.0
  %132 = vmatpush.msra.mxu0 0.0
  %133 = vmatpush.msra.mxu0 0.0
  %134 = vmatpush.msra.mxu0 0.0
  %135 = vmatpush.msra.mxu0 %v118
  %136 = vmatmul.f32.gmra.mxu0 %v112
  %v137 = vpop.f32.mrf.mxu0
  %v138 = vadd.f32 %v106, %v137
  %139 = vmatmul.f32.gmra.mxu0 %v115
  %v140 = vpop.f32.mrf.mxu0
  %v141 = vadd.f32 %v109, %v140
  %142 = vdwg.mxu0
  %143 = vrot.lane.b32.xlu0 %v70, 126
  %v144 = vpop.permute.xlu0 %143
  %v145 = vld [vmem:[%s1 + $0x20] sm:$0xff]
  %v146 = vld [vmem:[%s1 + $0x28] sm:$0xff]
  %v148 = vsel %vm77, %v145, 0
  %v151 = vsel %vm77, %v146, 0
  %v154 = vsel %vm84, %v144, 0
  %156 = vmatpush.msra.mxu0 0.0
  %157 = vmatpush.msra.mxu0 0.0
  %158 = vmatpush.msra.mxu0 0.0
  %159 = vmatpush.msra.mxu0 0.0
  %160 = vmatpush.msra.mxu0 0.0
  %161 = vmatpush.msra.mxu0 0.0
  %162 = vmatpush.msra.mxu0 0.0
  %163 = vmatpush.msra.mxu0 0.0
  %164 = vmatpush.msra.mxu0 0.0
  %165 = vmatpush.msra.mxu0 0.0
  %166 = vmatpush.msra.mxu0 0.0
  %167 = vmatpush.msra.mxu0 0.0
  %168 = vmatpush.msra.mxu0 0.0
  %169 = vmatpush.msra.mxu0 0.0
  %170 = vmatpush.msra.mxu0 0.0
  %171 = vmatpush.msra.mxu0 %v154
  %172 = vmatmul.f32.gmra.mxu0 %v148
  %v173 = vpop.f32.mrf.mxu0
  %v174 = vadd.f32 0.0, %v173
  %175 = vmatmul.f32.gmra.mxu0 %v151
  %v176 = vpop.f32.mrf.mxu0
  %v177 = vadd.f32 0.0, %v176
  %178 = vdwg.mxu0
  %v179 = vadd.f32 %v138, %v174
  %v180 = vadd.f32 %v141, %v177
  %181 = vrot.lane.b32.xlu0 %v70, 125
  %v182 = vpop.permute.xlu0 %181
  %v183 = vld [vmem:[%s1 + $0x30] sm:$0xff]
  %v184 = vld [vmem:[%s1 + $0x38] sm:$0xff]
  %v186 = vsel %vm77, %v183, 0
  %v189 = vsel %vm77, %v184, 0
  %v192 = vsel %vm84, %v182, 0
  %194 = vmatpush.msra.mxu0 0.0
  %195 = vmatpush.msra.mxu0 0.0
  %196 = vmatpush.msra.mxu0 0.0
  %197 = vmatpush.msra.mxu0 0.0
  %198 = vmatpush.msra.mxu0 0.0
  %199 = vmatpush.msra.mxu0 0.0
  %200 = vmatpush.msra.mxu0 0.0
  %201 = vmatpush.msra.mxu0 0.0
  %202 = vmatpush.msra.mxu0 0.0
  %203 = vmatpush.msra.mxu0 0.0
  %204 = vmatpush.msra.mxu0 0.0
  %205 = vmatpush.msra.mxu0 0.0
  %206 = vmatpush.msra.mxu0 0.0
  %207 = vmatpush.msra.mxu0 0.0
  %208 = vmatpush.msra.mxu0 0.0
  %209 = vmatpush.msra.mxu0 %v192
  %210 = vmatmul.f32.gmra.mxu0 %v186
  %v211 = vpop.f32.mrf.mxu0
  %v212 = vadd.f32 0.0, %v211
  %213 = vmatmul.f32.gmra.mxu0 %v189
  %v214 = vpop.f32.mrf.mxu0
  %v215 = vadd.f32 0.0, %v214
  %216 = vdwg.mxu0
  %v217 = vadd.f32 %v179, %v212
  %v218 = vadd.f32 %v180, %v215
  %v219 = vld [vmem:[%s2] sm:$0xff]
  %v220 = vld [vmem:[%s2 + $0x8] sm:$0xff]
  %222 = vset.pattern.permute.xlu0 0
  %223 = vperm.xlu0 %222, %v219
  %v224 = vpop.permute.xlu0 %223
  %227 = vset.pattern.permute.xlu0 0
  %228 = vperm.xlu0 %227, %v220
  %v229 = vpop.permute.xlu0 %228
  %v231 = vadd.f32 %v217, %v224
  %v232 = vadd.f32 %v218, %v229
  %v233 = vmax.f32 %v231, 0.0
  %v234 = vmax.f32 %v232, 0.0
  %v235 = vld [vmem:[%s1 + $0x40] sm:$0xf]
  %236 = vrot.lane.b32.xlu0 %v233, 127
  %v237 = vpop.permute.xlu0 %236
  %238 = vrot.lane.b32.xlu0 %v234, 127
  %v239 = vpop.permute.xlu0 %238
  %v240 = vld [vmem:[%s1 + $0x48] sm:$0xf]
  %vm241 = vcmask 130048
  %v243 = vsel %vm241, %v240, 0
  %245 = vmatpush.msra.mxu0 0.0
  %246 = vmatpush.msra.mxu0 0.0
  %247 = vmatpush.msra.mxu0 0.0
  %248 = vmatpush.msra.mxu0 0.0
  %249 = vmatpush.msra.mxu0 0.0
  %250 = vmatpush.msra.mxu0 0.0
  %251 = vmatpush.msra.mxu0 0.0
  %252 = vmatpush.msra.mxu0 0.0
  %253 = vmatpush.msra.mxu0 0.0
  %254 = vmatpush.msra.mxu0 0.0
  %255 = vmatpush.msra.mxu0 0.0
  %256 = vmatpush.msra.mxu0 0.0
  %257 = vmatpush.msra.mxu0 0.0
  %258 = vmatpush.msra.mxu0 0.0
  %259 = vmatpush.msra.mxu0 %v239
  %260 = vmatpush.msra.mxu0 %v237
  %261 = vmatmul.f32.gmra.mxu0 %v243
  %v262 = vpop.f32.mrf.mxu0
  %v263 = vadd.f32 0.0, %v262
  %264 = vdwg.mxu0
  %v266 = vsel %vm241, %v235, 0
  %268 = vmatpush.msra.mxu0 0.0
  %269 = vmatpush.msra.mxu0 0.0
  %270 = vmatpush.msra.mxu0 0.0
  %271 = vmatpush.msra.mxu0 0.0
  %272 = vmatpush.msra.mxu0 0.0
  %273 = vmatpush.msra.mxu0 0.0
  %274 = vmatpush.msra.mxu0 0.0
  %275 = vmatpush.msra.mxu0 0.0
  %276 = vmatpush.msra.mxu0 0.0
  %277 = vmatpush.msra.mxu0 0.0
  %278 = vmatpush.msra.mxu0 0.0
  %279 = vmatpush.msra.mxu0 0.0
  %280 = vmatpush.msra.mxu0 0.0
  %281 = vmatpush.msra.mxu0 0.0
  %282 = vmatpush.msra.mxu0 %v234
  %283 = vmatpush.msra.mxu0 %v233
  %284 = vmatmul.f32.gmra.mxu0 %v266
  %v285 = vpop.f32.mrf.mxu0
  %v286 = vadd.f32 %v263, %v285
  %287 = vdwg.mxu0
  %v288 = vld [vmem:[%s2 + $0x10] sm:$0xf]
  %290 = vset.pattern.permute.xlu0 0
  %291 = vperm.xlu0 %290, %v288
  %v292 = vpop.permute.xlu0 %291
  %v294 = vadd.f32 %v286, %v292
  %v295 = vtanh.pop %v294
  %v296 = vsel %vm57, %v16, %v56
  %297 = vrot.lane.b32.xlu0 %v16, 1
  %v298 = vpop.permute.xlu0 %297
  %v299 = vsel %vm61, %v298, %v296
  %300 = vrot.lane.b32.xlu0 %v16, 3
  %v301 = vpop.permute.xlu0 %300
  %v302 = vsel %vm63, %v301, %v299
  %v303 = vsel %vm67, %v65, %v302
  %v304 = vld [vmem:[%s1 + $0x50] sm:$0xf]
  %305 = vrot.lane.b32.xlu0 %v303, 127
  %v306 = vpop.permute.xlu0 %305
  %v307 = vld [vmem:[%s1 + $0x58] sm:$0xf]
  %v309 = vsel %vm77, %v307, 0
  %v312 = vsel %vm84, %v306, 0
  %314 = vmatpush.msra.mxu0 0.0
  %315 = vmatpush.msra.mxu0 0.0
  %316 = vmatpush.msra.mxu0 0.0
  %317 = vmatpush.msra.mxu0 0.0
  %318 = vmatpush.msra.mxu0 0.0
  %319 = vmatpush.msra.mxu0 0.0
  %320 = vmatpush.msra.mxu0 0.0
  %321 = vmatpush.msra.mxu0 0.0
  %322 = vmatpush.msra.mxu0 0.0
  %323 = vmatpush.msra.mxu0 0.0
  %324 = vmatpush.msra.mxu0 0.0
  %325 = vmatpush.msra.mxu0 0.0
  %326 = vmatpush.msra.mxu0 0.0
  %327 = vmatpush.msra.mxu0 0.0
  %328 = vmatpush.msra.mxu0 0.0
  %329 = vmatpush.msra.mxu0 %v312
  %330 = vmatmul.f32.gmra.mxu0 %v309
  %v331 = vpop.f32.mrf.mxu0
  %v332 = vadd.f32 0.0, %v331
  %333 = vdwg.mxu0
  %v335 = vsel %vm77, %v304, 0
  %v338 = vsel %vm84, %v303, 0
  %340 = vmatpush.msra.mxu0 0.0
  %341 = vmatpush.msra.mxu0 0.0
  %342 = vmatpush.msra.mxu0 0.0
  %343 = vmatpush.msra.mxu0 0.0
  %344 = vmatpush.msra.mxu0 0.0
  %345 = vmatpush.msra.mxu0 0.0
  %346 = vmatpush.msra.mxu0 0.0
  %347 = vmatpush.msra.mxu0 0.0
  %348 = vmatpush.msra.mxu0 0.0
  %349 = vmatpush.msra.mxu0 0.0
  %350 = vmatpush.msra.mxu0 0.0
  %351 = vmatpush.msra.mxu0 0.0
  %352 = vmatpush.msra.mxu0 0.0
  %353 = vmatpush.msra.mxu0 0.0
  %354 = vmatpush.msra.mxu0 0.0
  %355 = vmatpush.msra.mxu0 %v338
  %356 = vmatmul.f32.gmra.mxu0 %v335
  %v357 = vpop.f32.mrf.mxu0
  %v358 = vadd.f32 %v332, %v357
  %359 = vdwg.mxu0
  %360 = vrot.lane.b32.xlu0 %v303, 126
  %v361 = vpop.permute.xlu0 %360
  %v362 = vld [vmem:[%s1 + $0x60] sm:$0xf]
  %v364 = vsel %vm77, %v362, 0
  %v367 = vsel %vm84, %v361, 0
  %369 = vmatpush.msra.mxu0 0.0
  %370 = vmatpush.msra.mxu0 0.0
  %371 = vmatpush.msra.mxu0 0.0
  %372 = vmatpush.msra.mxu0 0.0
  %373 = vmatpush.msra.mxu0 0.0
  %374 = vmatpush.msra.mxu0 0.0
  %375 = vmatpush.msra.mxu0 0.0
  %376 = vmatpush.msra.mxu0 0.0
  %377 = vmatpush.msra.mxu0 0.0
  %378 = vmatpush.msra.mxu0 0.0
  %379 = vmatpush.msra.mxu0 0.0
  %380 = vmatpush.msra.mxu0 0.0
  %381 = vmatpush.msra.mxu0 0.0
  %382 = vmatpush.msra.mxu0 0.0
  %383 = vmatpush.msra.mxu0 0.0
  %384 = vmatpush.msra.mxu0 %v367
  %385 = vmatmul.f32.gmra.mxu0 %v364
  %v386 = vpop.f32.mrf.mxu0
  %v387 = vadd.f32 0.0, %v386
  %388 = vdwg.mxu0
  %v389 = vadd.f32 %v358, %v387
  %390 = vrot.lane.b32.xlu0 %v303, 125
  %v391 = vpop.permute.xlu0 %390
  %v392 = vld [vmem:[%s1 + $0x68] sm:$0xf]
  %v394 = vsel %vm77, %v392, 0
  %v397 = vsel %vm84, %v391, 0
  %399 = vmatpush.msra.mxu0 0.0
  %400 = vmatpush.msra.mxu0 0.0
  %401 = vmatpush.msra.mxu0 0.0
  %402 = vmatpush.msra.mxu0 0.0
  %403 = vmatpush.msra.mxu0 0.0
  %404 = vmatpush.msra.mxu0 0.0
  %405 = vmatpush.msra.mxu0 0.0
  %406 = vmatpush.msra.mxu0 0.0
  %407 = vmatpush.msra.mxu0 0.0
  %408 = vmatpush.msra.mxu0 0.0
  %409 = vmatpush.msra.mxu0 0.0
  %410 = vmatpush.msra.mxu0 0.0
  %411 = vmatpush.msra.mxu0 0.0
  %412 = vmatpush.msra.mxu0 0.0
  %413 = vmatpush.msra.mxu0 0.0
  %414 = vmatpush.msra.mxu0 %v397
  %415 = vmatmul.f32.gmra.mxu0 %v394
  %v416 = vpop.f32.mrf.mxu0
  %v417 = vadd.f32 0.0, %v416
  %418 = vdwg.mxu0
  %v419 = vadd.f32 %v389, %v417
  %v420 = vld [vmem:[%s2 + $0x18] sm:$0xf]
  %422 = vset.pattern.permute.xlu0 0
  %423 = vperm.xlu0 %422, %v420
  %v424 = vpop.permute.xlu0 %423
  %v426 = vadd.f32 %v419, %v424
  %v427 = vld [vmem:[%s1 + $0x70] sm:$0xf]
  %428 = vrot.lane.b32.xlu0 %v426, 127
  %v429 = vpop.permute.xlu0 %428
  %v430 = vld [vmem:[%s1 + $0x78] sm:$0xf]
  %v432 = vsel %vm77, %v430, 0
  %v435 = vsel %vm84, %v429, 0
  %437 = vmatpush.msra.mxu0 0.0
  %438 = vmatpush.msra.mxu0 0.0
  %439 = vmatpush.msra.mxu0 0.0
  %440 = vmatpush.msra.mxu0 0.0
  %441 = vmatpush.msra.mxu0 0.0
  %442 = vmatpush.msra.mxu0 0.0
  %443 = vmatpush.msra.mxu0 0.0
  %444 = vmatpush.msra.mxu0 0.0
  %445 = vmatpush.msra.mxu0 0.0
  %446 = vmatpush.msra.mxu0 0.0
  %447 = vmatpush.msra.mxu0 0.0
  %448 = vmatpush.msra.mxu0 0.0
  %449 = vmatpush.msra.mxu0 0.0
  %450 = vmatpush.msra.mxu0 0.0
  %451 = vmatpush.msra.mxu0 0.0
  %452 = vmatpush.msra.mxu0 %v435
  %453 = vmatmul.f32.gmra.mxu0 %v432
  %v454 = vpop.f32.mrf.mxu0
  %v455 = vadd.f32 0.0, %v454
  %456 = vdwg.mxu0
  %v458 = vsel %vm77, %v427, 0
  %v461 = vsel %vm84, %v426, 0
  %463 = vmatpush.msra.mxu0 0.0
  %464 = vmatpush.msra.mxu0 0.0
  %465 = vmatpush.msra.mxu0 0.0
  %466 = vmatpush.msra.mxu0 0.0
  %467 = vmatpush.msra.mxu0 0.0
  %468 = vmatpush.msra.mxu0 0.0
  %469 = vmatpush.msra.mxu0 0.0
  %470 = vmatpush.msra.mxu0 0.0
  %471 = vmatpush.msra.mxu0 0.0
  %472 = vmatpush.msra.mxu0 0.0
  %473 = vmatpush.msra.mxu0 0.0
  %474 = vmatpush.msra.mxu0 0.0
  %475 = vmatpush.msra.mxu0 0.0
  %476 = vmatpush.msra.mxu0 0.0
  %477 = vmatpush.msra.mxu0 0.0
  %478 = vmatpush.msra.mxu0 %v461
  %479 = vmatmul.f32.gmra.mxu0 %v458
  %v480 = vpop.f32.mrf.mxu0
  %v481 = vadd.f32 %v455, %v480
  %482 = vdwg.mxu0
  %v483 = vld [vmem:[%s2 + $0x20] sm:$0xf]
  %485 = vset.pattern.permute.xlu0 0
  %486 = vperm.xlu0 %485, %v483
  %v487 = vpop.permute.xlu0 %486
  %v489 = vadd.f32 %v481, %v487
  %v490 = vtanh.pop %v489
  %v491 = vmul.f32 %v490, 1.442695
  %v492 = vpow.pop %v491
  %v493 = vmul.f32 %v18, %v492
  %v494 = vsub.f32 %v493, %v295
  %495 = vst [vmem:[%s4] sm:$0xf] %v494
  %496 = vrot.lane.b32.xlu0 %v494, 2
  %v497 = vpop.permute.xlu0 %496
  %v498 = vsel %vm57, %v494, %v497
  %499 = vrot.lane.b32.xlu0 %v494, 1
  %v500 = vpop.permute.xlu0 %499
  %v501 = vsel %vm61, %v500, %v498
  %502 = vrot.lane.b32.xlu0 %v494, 3
  %v503 = vpop.permute.xlu0 %502
  %v504 = vsel %vm63, %v503, %v501
  %505 = vrot.lane.b32.xlu0 %v494, 4
  %v506 = vpop.permute.xlu0 %505
  %v507 = vsel %vm67, %v506, %v504
  %v508 = vld [vmem:[%s1 + $0x80] sm:$0xff]
  %v509 = vld [vmem:[%s1 + $0x88] sm:$0xff]
  %510 = vrot.lane.b32.xlu0 %v507, 127
  %v511 = vpop.permute.xlu0 %510
  %v512 = vld [vmem:[%s1 + $0x90] sm:$0xff]
  %v513 = vld [vmem:[%s1 + $0x98] sm:$0xff]
  %v515 = vsel %vm77, %v512, 0
  %v518 = vsel %vm77, %v513, 0
  %v521 = vsel %vm84, %v511, 0
  %523 = vmatpush.msra.mxu0 0.0
  %524 = vmatpush.msra.mxu0 0.0
  %525 = vmatpush.msra.mxu0 0.0
  %526 = vmatpush.msra.mxu0 0.0
  %527 = vmatpush.msra.mxu0 0.0
  %528 = vmatpush.msra.mxu0 0.0
  %529 = vmatpush.msra.mxu0 0.0
  %530 = vmatpush.msra.mxu0 0.0
  %531 = vmatpush.msra.mxu0 0.0
  %532 = vmatpush.msra.mxu0 0.0
  %533 = vmatpush.msra.mxu0 0.0
  %534 = vmatpush.msra.mxu0 0.0
  %535 = vmatpush.msra.mxu0 0.0
  %536 = vmatpush.msra.mxu0 0.0
  %537 = vmatpush.msra.mxu0 0.0
  %538 = vmatpush.msra.mxu0 %v521
  %539 = vmatmul.f32.gmra.mxu0 %v515
  %v540 = vpop.f32.mrf.mxu0
  %v541 = vadd.f32 0.0, %v540
  %542 = vmatmul.f32.gmra.mxu0 %v518
  %v543 = vpop.f32.mrf.mxu0
  %v544 = vadd.f32 0.0, %v543
  %545 = vdwg.mxu0
  %v547 = vsel %vm77, %v508, 0
  %v550 = vsel %vm77, %v509, 0
  %v553 = vsel %vm84, %v507, 0
  %555 = vmatpush.msra.mxu0 0.0
  %556 = vmatpush.msra.mxu0 0.0
  %557 = vmatpush.msra.mxu0 0.0
  %558 = vmatpush.msra.mxu0 0.0
  %559 = vmatpush.msra.mxu0 0.0
  %560 = vmatpush.msra.mxu0 0.0
  %561 = vmatpush.msra.mxu0 0.0
  %562 = vmatpush.msra.mxu0 0.0
  %563 = vmatpush.msra.mxu0 0.0
  %564 = vmatpush.msra.mxu0 0.0
  %565 = vmatpush.msra.mxu0 0.0
  %566 = vmatpush.msra.mxu0 0.0
  %567 = vmatpush.msra.mxu0 0.0
  %568 = vmatpush.msra.mxu0 0.0
  %569 = vmatpush.msra.mxu0 0.0
  %570 = vmatpush.msra.mxu0 %v553
  %571 = vmatmul.f32.gmra.mxu0 %v547
  %v572 = vpop.f32.mrf.mxu0
  %v573 = vadd.f32 %v541, %v572
  %574 = vmatmul.f32.gmra.mxu0 %v550
  %v575 = vpop.f32.mrf.mxu0
  %v576 = vadd.f32 %v544, %v575
  %577 = vdwg.mxu0
  %578 = vrot.lane.b32.xlu0 %v507, 126
  %v579 = vpop.permute.xlu0 %578
  %v580 = vld [vmem:[%s1 + $0xa0] sm:$0xff]
  %v581 = vld [vmem:[%s1 + $0xa8] sm:$0xff]
  %v583 = vsel %vm77, %v580, 0
  %v586 = vsel %vm77, %v581, 0
  %v589 = vsel %vm84, %v579, 0
  %591 = vmatpush.msra.mxu0 0.0
  %592 = vmatpush.msra.mxu0 0.0
  %593 = vmatpush.msra.mxu0 0.0
  %594 = vmatpush.msra.mxu0 0.0
  %595 = vmatpush.msra.mxu0 0.0
  %596 = vmatpush.msra.mxu0 0.0
  %597 = vmatpush.msra.mxu0 0.0
  %598 = vmatpush.msra.mxu0 0.0
  %599 = vmatpush.msra.mxu0 0.0
  %600 = vmatpush.msra.mxu0 0.0
  %601 = vmatpush.msra.mxu0 0.0
  %602 = vmatpush.msra.mxu0 0.0
  %603 = vmatpush.msra.mxu0 0.0
  %604 = vmatpush.msra.mxu0 0.0
  %605 = vmatpush.msra.mxu0 0.0
  %606 = vmatpush.msra.mxu0 %v589
  %607 = vmatmul.f32.gmra.mxu0 %v583
  %v608 = vpop.f32.mrf.mxu0
  %v609 = vadd.f32 0.0, %v608
  %610 = vmatmul.f32.gmra.mxu0 %v586
  %v611 = vpop.f32.mrf.mxu0
  %v612 = vadd.f32 0.0, %v611
  %613 = vdwg.mxu0
  %v614 = vadd.f32 %v573, %v609
  %v615 = vadd.f32 %v576, %v612
  %616 = vrot.lane.b32.xlu0 %v507, 125
  %v617 = vpop.permute.xlu0 %616
  %v618 = vld [vmem:[%s1 + $0xb0] sm:$0xff]
  %v619 = vld [vmem:[%s1 + $0xb8] sm:$0xff]
  %v621 = vsel %vm77, %v618, 0
  %v624 = vsel %vm77, %v619, 0
  %v627 = vsel %vm84, %v617, 0
  %629 = vmatpush.msra.mxu0 0.0
  %630 = vmatpush.msra.mxu0 0.0
  %631 = vmatpush.msra.mxu0 0.0
  %632 = vmatpush.msra.mxu0 0.0
  %633 = vmatpush.msra.mxu0 0.0
  %634 = vmatpush.msra.mxu0 0.0
  %635 = vmatpush.msra.mxu0 0.0
  %636 = vmatpush.msra.mxu0 0.0
  %637 = vmatpush.msra.mxu0 0.0
  %638 = vmatpush.msra.mxu0 0.0
  %639 = vmatpush.msra.mxu0 0.0
  %640 = vmatpush.msra.mxu0 0.0
  %641 = vmatpush.msra.mxu0 0.0
  %642 = vmatpush.msra.mxu0 0.0
  %643 = vmatpush.msra.mxu0 0.0
  %644 = vmatpush.msra.mxu0 %v627
  %645 = vmatmul.f32.gmra.mxu0 %v621
  %v646 = vpop.f32.mrf.mxu0
  %v647 = vadd.f32 0.0, %v646
  %648 = vmatmul.f32.gmra.mxu0 %v624
  %v649 = vpop.f32.mrf.mxu0
  %v650 = vadd.f32 0.0, %v649
  %651 = vdwg.mxu0
  %v652 = vadd.f32 %v614, %v647
  %v653 = vadd.f32 %v615, %v650
  %v654 = vld [vmem:[%s2 + $0x28] sm:$0xff]
  %v655 = vld [vmem:[%s2 + $0x30] sm:$0xff]
  %657 = vset.pattern.permute.xlu0 0
  %658 = vperm.xlu0 %657, %v654
  %v659 = vpop.permute.xlu0 %658
  %662 = vset.pattern.permute.xlu0 0
  %663 = vperm.xlu0 %662, %v655
  %v664 = vpop.permute.xlu0 %663
  %v666 = vadd.f32 %v652, %v659
  %v667 = vadd.f32 %v653, %v664
  %v668 = vmax.f32 %v666, 0.0
  %v669 = vmax.f32 %v667, 0.0
  %v670 = vld [vmem:[%s1 + $0xc0] sm:$0xf]
  %671 = vrot.lane.b32.xlu0 %v668, 127
  %v672 = vpop.permute.xlu0 %671
  %673 = vrot.lane.b32.xlu0 %v669, 127
  %v674 = vpop.permute.xlu0 %673
  %v675 = vld [vmem:[%s1 + $0xc8] sm:$0xf]
  %v677 = vsel %vm241, %v675, 0
  %679 = vmatpush.msra.mxu0 0.0
  %680 = vmatpush.msra.mxu0 0.0
  %681 = vmatpush.msra.mxu0 0.0
  %682 = vmatpush.msra.mxu0 0.0
  %683 = vmatpush.msra.mxu0 0.0
  %684 = vmatpush.msra.mxu0 0.0
  %685 = vmatpush.msra.mxu0 0.0
  %686 = vmatpush.msra.mxu0 0.0
  %687 = vmatpush.msra.mxu0 0.0
  %688 = vmatpush.msra.mxu0 0.0
  %689 = vmatpush.msra.mxu0 0.0
  %690 = vmatpush.msra.mxu0 0.0
  %691 = vmatpush.msra.mxu0 0.0
  %692 = vmatpush.msra.mxu0 0.0
  %693 = vmatpush.msra.mxu0 %v674
  %694 = vmatpush.msra.mxu0 %v672
  %695 = vmatmul.f32.gmra.mxu0 %v677
  %v696 = vpop.f32.mrf.mxu0
  %v697 = vadd.f32 0.0, %v696
  %698 = vdwg.mxu0
  %v700 = vsel %vm241, %v670, 0
  %702 = vmatpush.msra.mxu0 0.0
  %703 = vmatpush.msra.mxu0 0.0
  %704 = vmatpush.msra.mxu0 0.0
  %705 = vmatpush.msra.mxu0 0.0
  %706 = vmatpush.msra.mxu0 0.0
  %707 = vmatpush.msra.mxu0 0.0
  %708 = vmatpush.msra.mxu0 0.0
  %709 = vmatpush.msra.mxu0 0.0
  %710 = vmatpush.msra.mxu0 0.0
  %711 = vmatpush.msra.mxu0 0.0
  %712 = vmatpush.msra.mxu0 0.0
  %713 = vmatpush.msra.mxu0 0.0
  %714 = vmatpush.msra.mxu0 0.0
  %715 = vmatpush.msra.mxu0 0.0
  %716 = vmatpush.msra.mxu0 %v669
  %717 = vmatpush.msra.mxu0 %v668
  %718 = vmatmul.f32.gmra.mxu0 %v700
  %v719 = vpop.f32.mrf.mxu0
  %v720 = vadd.f32 %v697, %v719
  %721 = vdwg.mxu0
  %v722 = vld [vmem:[%s2 + $0x38] sm:$0xf]
  %724 = vset.pattern.permute.xlu0 0
  %725 = vperm.xlu0 %724, %v722
  %v726 = vpop.permute.xlu0 %725
  %v728 = vadd.f32 %v720, %v726
  %v729 = vtanh.pop %v728
  %v730 = vld [vmem:[%s1 + $0xd0] sm:$0xf]
  %v731 = vld [vmem:[%s1 + $0xd8] sm:$0xf]
  %v733 = vsel %vm77, %v731, 0
  %735 = vmatpush.msra.mxu0 0.0
  %736 = vmatpush.msra.mxu0 0.0
  %737 = vmatpush.msra.mxu0 0.0
  %738 = vmatpush.msra.mxu0 0.0
  %739 = vmatpush.msra.mxu0 0.0
  %740 = vmatpush.msra.mxu0 0.0
  %741 = vmatpush.msra.mxu0 0.0
  %742 = vmatpush.msra.mxu0 0.0
  %743 = vmatpush.msra.mxu0 0.0
  %744 = vmatpush.msra.mxu0 0.0
  %745 = vmatpush.msra.mxu0 0.0
  %746 = vmatpush.msra.mxu0 0.0
  %747 = vmatpush.msra.mxu0 0.0
  %748 = vmatpush.msra.mxu0 0.0
  %749 = vmatpush.msra.mxu0 0.0
  %750 = vmatpush.msra.mxu0 %v521
  %751 = vmatmul.f32.gmra.mxu0 %v733
  %v752 = vpop.f32.mrf.mxu0
  %v753 = vadd.f32 0.0, %v752
  %754 = vdwg.mxu0
  %v756 = vsel %vm77, %v730, 0
  %758 = vmatpush.msra.mxu0 0.0
  %759 = vmatpush.msra.mxu0 0.0
  %760 = vmatpush.msra.mxu0 0.0
  %761 = vmatpush.msra.mxu0 0.0
  %762 = vmatpush.msra.mxu0 0.0
  %763 = vmatpush.msra.mxu0 0.0
  %764 = vmatpush.msra.mxu0 0.0
  %765 = vmatpush.msra.mxu0 0.0
  %766 = vmatpush.msra.mxu0 0.0
  %767 = vmatpush.msra.mxu0 0.0
  %768 = vmatpush.msra.mxu0 0.0
  %769 = vmatpush.msra.mxu0 0.0
  %770 = vmatpush.msra.mxu0 0.0
  %771 = vmatpush.msra.mxu0 0.0
  %772 = vmatpush.msra.mxu0 0.0
  %773 = vmatpush.msra.mxu0 %v553
  %774 = vmatmul.f32.gmra.mxu0 %v756
  %v775 = vpop.f32.mrf.mxu0
  %v776 = vadd.f32 %v753, %v775
  %777 = vdwg.mxu0
  %v778 = vld [vmem:[%s1 + $0xe0] sm:$0xf]
  %v780 = vsel %vm77, %v778, 0
  %782 = vmatpush.msra.mxu0 0.0
  %783 = vmatpush.msra.mxu0 0.0
  %784 = vmatpush.msra.mxu0 0.0
  %785 = vmatpush.msra.mxu0 0.0
  %786 = vmatpush.msra.mxu0 0.0
  %787 = vmatpush.msra.mxu0 0.0
  %788 = vmatpush.msra.mxu0 0.0
  %789 = vmatpush.msra.mxu0 0.0
  %790 = vmatpush.msra.mxu0 0.0
  %791 = vmatpush.msra.mxu0 0.0
  %792 = vmatpush.msra.mxu0 0.0
  %793 = vmatpush.msra.mxu0 0.0
  %794 = vmatpush.msra.mxu0 0.0
  %795 = vmatpush.msra.mxu0 0.0
  %796 = vmatpush.msra.mxu0 0.0
  %797 = vmatpush.msra.mxu0 %v589
  %798 = vmatmul.f32.gmra.mxu0 %v780
  %v799 = vpop.f32.mrf.mxu0
  %v800 = vadd.f32 0.0, %v799
  %801 = vdwg.mxu0
  %v802 = vadd.f32 %v776, %v800
  %v803 = vld [vmem:[%s1 + $0xe8] sm:$0xf]
  %v805 = vsel %vm77, %v803, 0
  %807 = vmatpush.msra.mxu0 0.0
  %808 = vmatpush.msra.mxu0 0.0
  %809 = vmatpush.msra.mxu0 0.0
  %810 = vmatpush.msra.mxu0 0.0
  %811 = vmatpush.msra.mxu0 0.0
  %812 = vmatpush.msra.mxu0 0.0
  %813 = vmatpush.msra.mxu0 0.0
  %814 = vmatpush.msra.mxu0 0.0
  %815 = vmatpush.msra.mxu0 0.0
  %816 = vmatpush.msra.mxu0 0.0
  %817 = vmatpush.msra.mxu0 0.0
  %818 = vmatpush.msra.mxu0 0.0
  %819 = vmatpush.msra.mxu0 0.0
  %820 = vmatpush.msra.mxu0 0.0
  %821 = vmatpush.msra.mxu0 0.0
  %822 = vmatpush.msra.mxu0 %v627
  %823 = vmatmul.f32.gmra.mxu0 %v805
  %v824 = vpop.f32.mrf.mxu0
  %v825 = vadd.f32 0.0, %v824
  %826 = vdwg.mxu0
  %v827 = vadd.f32 %v802, %v825
  %v828 = vld [vmem:[%s2 + $0x40] sm:$0xf]
  %830 = vset.pattern.permute.xlu0 0
  %831 = vperm.xlu0 %830, %v828
  %v832 = vpop.permute.xlu0 %831
  %v834 = vadd.f32 %v827, %v832
  %v835 = vld [vmem:[%s1 + $0xf0] sm:$0xf]
  %836 = vrot.lane.b32.xlu0 %v834, 127
  %v837 = vpop.permute.xlu0 %836
  %v838 = vld [vmem:[%s1 + $0xf8] sm:$0xf]
  %v840 = vsel %vm77, %v838, 0
  %v843 = vsel %vm84, %v837, 0
  %845 = vmatpush.msra.mxu0 0.0
  %846 = vmatpush.msra.mxu0 0.0
  %847 = vmatpush.msra.mxu0 0.0
  %848 = vmatpush.msra.mxu0 0.0
  %849 = vmatpush.msra.mxu0 0.0
  %850 = vmatpush.msra.mxu0 0.0
  %851 = vmatpush.msra.mxu0 0.0
  %852 = vmatpush.msra.mxu0 0.0
  %853 = vmatpush.msra.mxu0 0.0
  %854 = vmatpush.msra.mxu0 0.0
  %855 = vmatpush.msra.mxu0 0.0
  %856 = vmatpush.msra.mxu0 0.0
  %857 = vmatpush.msra.mxu0 0.0
  %858 = vmatpush.msra.mxu0 0.0
  %859 = vmatpush.msra.mxu0 0.0
  %860 = vmatpush.msra.mxu0 %v843
  %861 = vmatmul.f32.gmra.mxu0 %v840
  %v862 = vpop.f32.mrf.mxu0
  %v863 = vadd.f32 0.0, %v862
  %864 = vdwg.mxu0
  %v866 = vsel %vm77, %v835, 0
  %v869 = vsel %vm84, %v834, 0
  %871 = vmatpush.msra.mxu0 0.0
  %872 = vmatpush.msra.mxu0 0.0
  %873 = vmatpush.msra.mxu0 0.0
  %874 = vmatpush.msra.mxu0 0.0
  %875 = vmatpush.msra.mxu0 0.0
  %876 = vmatpush.msra.mxu0 0.0
  %877 = vmatpush.msra.mxu0 0.0
  %878 = vmatpush.msra.mxu0 0.0
  %879 = vmatpush.msra.mxu0 0.0
  %880 = vmatpush.msra.mxu0 0.0
  %881 = vmatpush.msra.mxu0 0.0
  %882 = vmatpush.msra.mxu0 0.0
  %883 = vmatpush.msra.mxu0 0.0
  %884 = vmatpush.msra.mxu0 0.0
  %885 = vmatpush.msra.mxu0 0.0
  %886 = vmatpush.msra.mxu0 %v869
  %887 = vmatmul.f32.gmra.mxu0 %v866
  %v888 = vpop.f32.mrf.mxu0
  %v889 = vadd.f32 %v863, %v888
  %890 = vdwg.mxu0
  %v891 = vld [vmem:[%s2 + $0x48] sm:$0xf]
  %893 = vset.pattern.permute.xlu0 0
  %894 = vperm.xlu0 %893, %v891
  %v895 = vpop.permute.xlu0 %894
  %v897 = vadd.f32 %v889, %v895
  %v898 = vtanh.pop %v897
  %v899 = vmul.f32 %v898, 1.442695
  %v900 = vpow.pop %v899
  %v901 = vmul.f32 %v16, %v900
  %v902 = vadd.f32 %v901, %v729
  %903 = vst [vmem:[%s3] sm:$0xf] %v902
  // Predicated region
  $region14: #{_lambda_.1} parent=0 // pred_check
    _
  $region15: #{_lambda_.1} parent=0 // pred_check_branch
    %905 = sbr.rel (0) target = $region17
  $region16: #{_lambda_.1} parent=0 // pred_region
    _
  $region17: #{_lambda_.1} parent=0 // pred_fallthru
    _
  // Predicated region
  $region18: #{_lambda_.1} parent=0 // pred_check
    _
  $region19: #{_lambda_.1} parent=0 // pred_check_branch
    %907 = sbr.rel (0) target = $region21
  $region20: #{_lambda_.1} parent=0 // pred_region
    _
  $region21: #{_lambda_.1} parent=0 // pred_fallthru
    _
  // Predicated region
  $region22: #{_lambda_.1} parent=0 // pred_check
    _
  $region23: #{_lambda_.1} parent=0 // pred_check_branch
    %909 = sbr.rel (0) target = $region25
  $region24: #{_lambda_.1} parent=0 // pred_region
    _
  $region25: #{_lambda_.1} parent=0 // pred_fallthru
    _
  // Predicated region
  $region26: #{_lambda_.1} parent=0 // pred_check
    _
  $region27: #{_lambda_.1} parent=0 // pred_check_branch
    %911 = sbr.rel (0) target = $region29
  $region28: #{_lambda_.1} parent=0 // pred_region
    _
  $region29: #{_lambda_.1} parent=0 // pred_fallthru
    _

</llo_original>
